<compile_context>
chip_gen: v5e
topology: v5e:2x2
jax: 0.10.0
libtpu: 0.0.40
codegen_flags: <defaults>
</compile_context>

<pallas_src>
import functools

import jax
import jax.numpy as jnp
from jax.experimental import pallas as pl
from jax.experimental.pallas import tpu as pltpu


def _round_up(n, m):
    return ((n + m - 1) // m) * m


def _pad_lane(n):
    # 128-lane alignment for small dims, 256-alignment (v6e/v7x MXU tile) above.
    return _round_up(n, 128) if n <= 128 else _round_up(n, 256)


def _choose_block_k(in_pad):
    # Largest of (512, 256, 128) that divides in_pad; in_pad is always a
    # multiple of 128 by construction, so this always succeeds.
    for bk in (512, 256, 128):
        if in_pad % bk == 0:
            return min(bk, in_pad)
    return in_pad


def _vmem_limit_bytes():
    # Leave headroom on v7x (64 MiB physical VMEM); 64 MiB is safe on v5e/v6e.
    try:
        cap = pltpu.get_tpu_info().vmem_capacity_bytes
        return int(min(64 * 1024 * 1024, (cap * 3) // 4))
    except Exception:
        return 48 * 1024 * 1024


def head_kernel(x_ref, w1_ref, b1_ref, gamma_ref, beta_ref, w2_ref, b2_ref,
                o_ref, acc_ref, *, true_b, inv_n):
    k = pl.program_id(0)

    @pl.when(k == 0)
    def _():
        acc_ref[...] = jnp.zeros_like(acc_ref)

    # ---- layer1, k-tile of hidden columns: h = x @ W1[:, kt] + b1[kt] ----
    # bf16 operands, f32 MXU accumulation.
    h = jnp.dot(x_ref[...], w1_ref[...], preferred_element_type=jnp.float32)
    h = h + b1_ref[...]

    # ---- BatchNorm1d (training mode): batch mean / biased variance over the
    # TRUE batch rows only (padded rows carry h = b1, so they must be masked).
    bp = h.shape[0]
    if bp != true_b:
        row = jax.lax.broadcasted_iota(jnp.int32, (bp, 1), 0)
        valid = (row < true_b).astype(jnp.float32)
        hm = h * valid
    else:
        hm = h
    s = jnp.sum(hm, axis=0, keepdims=True)
    ss = jnp.sum(hm * h, axis=0, keepdims=True)
    mean = s * inv_n
    var = jnp.maximum(ss * inv_n - mean * mean, 0.0)  # clamp one-pass cancellation
    hn = (h - mean) * jax.lax.rsqrt(var + 1e-5)
    hn = hn * gamma_ref[...] + beta_ref[...]

    # ---- ReLU ----
    hn = jnp.maximum(hn, 0.0)

    # ---- layer2 partial product: acc += relu(...) @ W2[kt, :] ----
    acc_ref[...] += jnp.dot(hn.astype(jnp.bfloat16), w2_ref[...],
                            preferred_element_type=jnp.float32)

    @pl.when(k == pl.num_programs(0) - 1)
    def _():
        o_ref[...] = (acc_ref[...] + b2_ref[...]).astype(o_ref.dtype)


def prepare_head_params(w1_t, b1, gamma, beta, w2_t, b2):
    """Pad (lane-dense) and cast the weights ONCE at init time.

    Zero padding is exact: padded hidden columns stay 0 through BN
    (gamma/beta padded with 0) and contribute nothing through the zero-padded
    W2 rows; padded output columns are sliced off after the kernel.
    """
    in_size = w1_t.shape[0]
    out_size = w2_t.shape[1]
    in_pad = _pad_lane(in_size)
    out_pad = _pad_lane(out_size)
    dpi, dpo = in_pad - in_size, out_pad - out_size

    w1_p = jnp.pad(w1_t, ((0, dpi), (0, dpi))).astype(jnp.bfloat16)
    b1_p = jnp.pad(b1, ((0, 0), (0, dpi))).astype(jnp.float32)
    gamma_p = jnp.pad(gamma, ((0, 0), (0, dpi))).astype(jnp.float32)
    beta_p = jnp.pad(beta, ((0, 0), (0, dpi))).astype(jnp.float32)
    w2_p = jnp.pad(w2_t, ((0, dpi), (0, dpo))).astype(jnp.bfloat16)
    b2_p = jnp.pad(b2, ((0, 0), (0, dpo))).astype(jnp.float32)
    return (w1_p, b1_p, gamma_p, beta_p, w2_p, b2_p), out_size


@functools.partial(jax.jit, static_argnames=("out_size",))
def head_forward(x, w1_p, b1_p, gamma_p, beta_p, w2_p, b2_p, *, out_size):
    """x: (B, in_size) f32; weights already padded/cast by prepare_head_params."""
    B, in_size = x.shape
    in_pad = w1_p.shape[0]
    out_pad = w2_p.shape[1]
    b_pad = _round_up(max(B, 8), 8)  # sublane-aligned batch rows

    # Only the activation is padded per call (weights were padded at init).
    x_p = jnp.pad(x, ((0, b_pad - B), (0, in_pad - in_size))).astype(jnp.bfloat16)

    block_k = _choose_block_k(in_pad)
    nk = in_pad // block_k

    kernel = functools.partial(head_kernel, true_b=B, inv_n=float(1.0 / B))

    grid_spec = pltpu.PrefetchScalarGridSpec(
        num_scalar_prefetch=0,
        grid=(nk,),
        in_specs=[
            pl.BlockSpec((b_pad, in_pad), lambda k: (0, 0)),     # x (resident)
            pl.BlockSpec((in_pad, block_k), lambda k: (0, k)),   # W1 column tile
            pl.BlockSpec((1, block_k), lambda k: (0, k)),        # b1 tile
            pl.BlockSpec((1, block_k), lambda k: (0, k)),        # gamma tile
            pl.BlockSpec((1, block_k), lambda k: (0, k)),        # beta tile
            pl.BlockSpec((block_k, out_pad), lambda k: (k, 0)),  # W2 row tile
            pl.BlockSpec((1, out_pad), lambda k: (0, 0)),        # b2 (resident)
        ],
        out_specs=pl.BlockSpec((b_pad, out_pad), lambda k: (0, 0)),
        scratch_shapes=[pltpu.VMEM((b_pad, out_pad), jnp.float32)],
    )

    y_pad = pl.pallas_call(
        kernel,
        out_shape=jax.ShapeDtypeStruct((b_pad, out_pad), jnp.float32),
        grid_spec=grid_spec,
        compiler_params=pltpu.CompilerParams(
            dimension_semantics=("arbitrary",),
            vmem_limit_bytes=_vmem_limit_bytes(),
        ),
    )(x_p, w1_p, b1_p, gamma_p, beta_p, w2_p, b2_p)

    # Slice the real batch rows / output columns back out.
    return y_pad[:B, :out_size]


def init_params(key, in_size, out_size):
    # Deterministic synthetic init (matches PyTorch param SHAPES, not values).
    k1, k2, k3, k4 = jax.random.split(key, 4)
    bound1 = 1.0 / jnp.sqrt(in_size)
    # nn.Linear stores (out, in); we keep the transposed (in, out) layout.
    w1_t = jax.random.uniform(k1, (in_size, in_size), jnp.float32, -bound1, bound1)
    b1 = jax.random.uniform(k2, (1, in_size), jnp.float32, -bound1, bound1)
    w2_t = jax.random.uniform(k3, (in_size, out_size), jnp.float32, -bound1, bound1)
    b2 = jax.random.uniform(k4, (1, out_size), jnp.float32, -bound1, bound1)
    # BatchNorm1d affine params: gamma=1, beta=0 (PyTorch default init).
    gamma = jnp.ones((1, in_size), jnp.float32)
    beta = jnp.zeros((1, in_size), jnp.float32)
    return w1_t, b1, gamma, beta, w2_t, b2


def head_reference(x, w1_t, b1, gamma, beta, w2_t, b2):
    """Pure-JAX reference with matching bf16 matmul inputs / f32 accumulation."""
    h = jnp.dot(x.astype(jnp.bfloat16), w1_t.astype(jnp.bfloat16),
                preferred_element_type=jnp.float32) + b1
    mean = jnp.mean(h, axis=0, keepdims=True)
    var = jnp.mean((h - mean) ** 2, axis=0, keepdims=True)
    h = (h - mean) * jax.lax.rsqrt(var + 1e-5) * gamma + beta
    h = jnp.maximum(h, 0.0)
    return jnp.dot(h.astype(jnp.bfloat16), w2_t.astype(jnp.bfloat16),
                   preferred_element_type=jnp.float32) + b2


if __name__ == "__main__":
    B, in_size, out_size = 8, 32, 16

    key = jax.random.PRNGKey(0)
    kx, kp = jax.random.split(key)
    x = jax.random.normal(kx, (B, in_size), jnp.float32)

    raw_params = init_params(kp, in_size, out_size)
    padded_params, out_sz = prepare_head_params(*raw_params)

    y = head_forward(x, *padded_params, out_size=out_sz)
    jax.block_until_ready(y)

    assert y.shape == (B, out_size)
    assert y.dtype == jnp.float32

    y_ref = head_reference(x, *raw_params)
    assert jnp.allclose(y, y_ref, atol=1e-2, rtol=1e-2), float(
        jnp.max(jnp.abs(y - y_ref)))

    print("KERNEL_OK")
</pallas_src>

<mosaic_0001>
module attributes {stable_mosaic.version = 11 : i64} {
  func.func @head_kernel(%arg0: i32, %arg1: memref<8x128xbf16, #tpu.memory_space<vmem>>, %arg2: memref<128x128xbf16, #tpu.memory_space<vmem>>, %arg3: memref<1x128xf32, #tpu.memory_space<vmem>>, %arg4: memref<1x128xf32, #tpu.memory_space<vmem>>, %arg5: memref<1x128xf32, #tpu.memory_space<vmem>>, %arg6: memref<128x128xbf16, #tpu.memory_space<vmem>>, %arg7: memref<1x128xf32, #tpu.memory_space<vmem>>, %arg8: memref<8x128xf32, #tpu.memory_space<vmem>>, %arg9: memref<8x128xf32, #tpu.memory_space<vmem>>) attributes {dimension_semantics = [#tpu.dimension_semantics<arbitrary>], iteration_bounds = array<i64: 1>, scalar_prefetch = 0 : i64, scratch_operands = 1 : i64, tpu.core_type = #tpu.core_type<tc>, window_params = [{pipeline_mode = #tpu.pipeline_mode<synchronous>, transform_indices = @transform_0, window_bounds = array<i64: 8, 128>}, {transform_indices = @transform_1, window_bounds = array<i64: 128, 128>}, {transform_indices = @transform_2, window_bounds = array<i64: 1, 128>}, {transform_indices = @transform_3, window_bounds = array<i64: 1, 128>}, {transform_indices = @transform_4, window_bounds = array<i64: 1, 128>}, {transform_indices = @transform_5, window_bounds = array<i64: 128, 128>}, {pipeline_mode = #tpu.pipeline_mode<synchronous>, transform_indices = @transform_6, window_bounds = array<i64: 1, 128>}, {pipeline_mode = #tpu.pipeline_mode<synchronous>, transform_indices = @transform_7, window_bounds = array<i64: 8, 128>}]} {
    %c0_i32 = arith.constant 0 : i32
    %0 = arith.cmpi eq, %arg0, %c0_i32 : i32
    %1 = arith.extui %0 : i1 to i32
    %c0_i32_0 = arith.constant 0 : i32
    %2 = arith.cmpi ne, %1, %c0_i32_0 : i32
    scf.if %2 {
      %cst_26 = arith.constant 0.000000e+00 : f32
      %46 = vector.broadcast %cst_26 : f32 to vector<8x128xf32>
      %c0_27 = arith.constant 0 : index
      %c0_28 = arith.constant 0 : index
      %47 = vector.load %arg9[%c0_27, %c0_28] : memref<8x128xf32, #tpu.memory_space<vmem>>, vector<8x128xf32>
      tpu.vector_store %arg9[%c0_27, %c0_28], %46 {strides = array<i32>} : memref<8x128xf32, #tpu.memory_space<vmem>>, vector<8x128xf32>,
    } else {
    }
    %c0 = arith.constant 0 : index
    %c0_1 = arith.constant 0 : index
    %3 = vector.load %arg1[%c0, %c0_1] : memref<8x128xbf16, #tpu.memory_space<vmem>>, vector<8x128xbf16>
    %c0_2 = arith.constant 0 : index
    %c0_3 = arith.constant 0 : index
    %4 = vector.load %arg2[%c0_2, %c0_3] : memref<128x128xbf16, #tpu.memory_space<vmem>>, vector<128x128xbf16>
    %cst = arith.constant dense<0.000000e+00> : vector<8x128xf32>
    %5 = tpu.matmul %3, %4, %cst {dimension_numbers = #tpu.dot_dimension_numbers<[1], [0], [0], [1], [0, 0, 1, 1], [], []>} : vector<8x128xbf16>, vector<128x128xbf16>, vector<8x128xf32> -> vector<8x128xf32>
    %c0_4 = arith.constant 0 : index
    %c0_5 = arith.constant 0 : index
    %6 = vector.load %arg3[%c0_4, %c0_5] : memref<1x128xf32, #tpu.memory_space<vmem>>, vector<1x128xf32>
    %7 = vector.broadcast %6 : vector<1x128xf32> to vector<8x128xf32>
    %8 = arith.addf %5, %7 : vector<8x128xf32>
    %cst_6 = arith.constant dense<0.000000e+00> : vector<128xf32>
    %9 = vector.multi_reduction <add>, %8, %cst_6 [0] : vector<8x128xf32> to vector<128xf32>
    %10 = vector.shape_cast %9 : vector<128xf32> to vector<1x128xf32>
    %11 = arith.mulf %8, %8 : vector<8x128xf32>
    %cst_7 = arith.constant dense<0.000000e+00> : vector<128xf32>
    %12 = vector.multi_reduction <add>, %11, %cst_7 [0] : vector<8x128xf32> to vector<128xf32>
    %13 = vector.shape_cast %12 : vector<128xf32> to vector<1x128xf32>
    %cst_8 = arith.constant 1.250000e-01 : f32
    %14 = vector.broadcast %cst_8 : f32 to vector<1x128xf32>
    %15 = arith.mulf %10, %14 : vector<1x128xf32>
    %cst_9 = arith.constant 1.250000e-01 : f32
    %16 = vector.broadcast %cst_9 : f32 to vector<1x128xf32>
    %17 = arith.mulf %13, %16 : vector<1x128xf32>
    %18 = arith.mulf %15, %15 : vector<1x128xf32>
    %19 = arith.subf %17, %18 : vector<1x128xf32>
    %cst_10 = arith.constant 0.000000e+00 : f32
    %20 = vector.broadcast %cst_10 : f32 to vector<1x128xf32>
    %21 = arith.maximumf %19, %20 : vector<1x128xf32>
    %22 = vector.broadcast %15 : vector<1x128xf32> to vector<8x128xf32>
    %23 = arith.subf %8, %22 : vector<8x128xf32>
    %cst_11 = arith.constant 9.99999974E-6 : f32
    %24 = vector.broadcast %cst_11 : f32 to vector<1x128xf32>
    %25 = arith.addf %21, %24 : vector<1x128xf32>
    %26 = math.rsqrt %25 : vector<1x128xf32>
    %27 = vector.broadcast %26 : vector<1x128xf32> to vector<8x128xf32>
    %28 = arith.mulf %23, %27 : vector<8x128xf32>
    %c0_12 = arith.constant 0 : index
    %c0_13 = arith.constant 0 : index
    %29 = vector.load %arg4[%c0_12, %c0_13] : memref<1x128xf32, #tpu.memory_space<vmem>>, vector<1x128xf32>
    %30 = vector.broadcast %29 : vector<1x128xf32> to vector<8x128xf32>
    %31 = arith.mulf %28, %30 : vector<8x128xf32>
    %c0_14 = arith.constant 0 : index
    %c0_15 = arith.constant 0 : index
    %32 = vector.load %arg5[%c0_14, %c0_15] : memref<1x128xf32, #tpu.memory_space<vmem>>, vector<1x128xf32>
    %33 = vector.broadcast %32 : vector<1x128xf32> to vector<8x128xf32>
    %34 = arith.addf %31, %33 : vector<8x128xf32>
    %cst_16 = arith.constant 0.000000e+00 : f32
    %35 = vector.broadcast %cst_16 : f32 to vector<8x128xf32>
    %36 = arith.maximumf %34, %35 : vector<8x128xf32>
    %c0_17 = arith.constant 0 : index
    %c0_18 = arith.constant 0 : index
    %37 = vector.load %arg9[%c0_17, %c0_18] : memref<8x128xf32, #tpu.memory_space<vmem>>, vector<8x128xf32>
    %38 = arith.truncf %36 : vector<8x128xf32> to vector<8x128xbf16>
    %c0_19 = arith.constant 0 : index
    %c0_20 = arith.constant 0 : index
    %39 = vector.load %arg6[%c0_19, %c0_20] : memref<128x128xbf16, #tpu.memory_space<vmem>>, vector<128x128xbf16>
    %cst_21 = arith.constant dense<0.000000e+00> : vector<8x128xf32>
    %40 = tpu.matmul %38, %39, %cst_21 {dimension_numbers = #tpu.dot_dimension_numbers<[1], [0], [0], [1], [0, 0, 1, 1], [], []>} : vector<8x128xbf16>, vector<128x128xbf16>, vector<8x128xf32> -> vector<8x128xf32>
    %41 = arith.addf %37, %40 : vector<8x128xf32>
    %c0_22 = arith.constant 0 : index
    %c0_23 = arith.constant 0 : index
    %42 = vector.load %arg9[%c0_22, %c0_23] : memref<8x128xf32, #tpu.memory_space<vmem>>, vector<8x128xf32>
    tpu.vector_store %arg9[%c0_22, %c0_23], %41 {strides = array<i32>} : memref<8x128xf32, #tpu.memory_space<vmem>>, vector<8x128xf32>,
    %c0_i32_24 = arith.constant 0 : i32
    %43 = arith.cmpi eq, %arg0, %c0_i32_24 : i32
    %44 = arith.extui %43 : i1 to i32
    %c0_i32_25 = arith.constant 0 : i32
    %45 = arith.cmpi ne, %44, %c0_i32_25 : i32
    scf.if %45 {
      %c0_26 = arith.constant 0 : index
      %c0_27 = arith.constant 0 : index
      %46 = vector.load %arg9[%c0_26, %c0_27] : memref<8x128xf32, #tpu.memory_space<vmem>>, vector<8x128xf32>
      %c0_28 = arith.constant 0 : index
      %c0_29 = arith.constant 0 : index
      %47 = vector.load %arg7[%c0_28, %c0_29] : memref<1x128xf32, #tpu.memory_space<vmem>>, vector<1x128xf32>
      %48 = vector.broadcast %47 : vector<1x128xf32> to vector<8x128xf32>
      %49 = arith.addf %46, %48 : vector<8x128xf32>
      %c0_30 = arith.constant 0 : index
      %c0_31 = arith.constant 0 : index
      %50 = vector.load %arg8[%c0_30, %c0_31] : memref<8x128xf32, #tpu.memory_space<vmem>>, vector<8x128xf32>
      tpu.vector_store %arg8[%c0_30, %c0_31], %49 {strides = array<i32>} : memref<8x128xf32, #tpu.memory_space<vmem>>, vector<8x128xf32>,
    } else {
    }
    return
  }
  func.func @transform_0(%arg0: i32) -> (i32, i32) {
    %c0_i32 = arith.constant 0 : i32
    %c0_i32_0 = arith.constant 0 : i32
    %c0_i32_1 = arith.constant 0 : i32
    return %c0_i32, %c0_i32_0 : i32, i32
  }
  func.func @transform_1(%arg0: i32) -> (i32, i32) {
    %c0_i32 = arith.constant 0 : i32
    %c0_i32_0 = arith.constant 0 : i32
    return %c0_i32, %arg0 : i32, i32
  }
  func.func @transform_2(%arg0: i32) -> (i32, i32) {
    %c0_i32 = arith.constant 0 : i32
    %c0_i32_0 = arith.constant 0 : i32
    return %c0_i32, %arg0 : i32, i32
  }
  func.func @transform_3(%arg0: i32) -> (i32, i32) {
    %c0_i32 = arith.constant 0 : i32
    %c0_i32_0 = arith.constant 0 : i32
    return %c0_i32, %arg0 : i32, i32
  }
  func.func @transform_4(%arg0: i32) -> (i32, i32) {
    %c0_i32 = arith.constant 0 : i32
    %c0_i32_0 = arith.constant 0 : i32
    return %c0_i32, %arg0 : i32, i32
  }
  func.func @transform_5(%arg0: i32) -> (i32, i32) {
    %c0_i32 = arith.constant 0 : i32
    %c0_i32_0 = arith.constant 0 : i32
    return %arg0, %c0_i32 : i32, i32
  }
  func.func @transform_6(%arg0: i32) -> (i32, i32) {
    %c0_i32 = arith.constant 0 : i32
    %c0_i32_0 = arith.constant 0 : i32
    %c0_i32_1 = arith.constant 0 : i32
    return %c0_i32, %c0_i32_0 : i32, i32
  }
  func.func @transform_7(%arg0: i32) -> (i32, i32) {
    %c0_i32 = arith.constant 0 : i32
    %c0_i32_0 = arith.constant 0 : i32
    %c0_i32_1 = arith.constant 0 : i32
    return %c0_i32, %c0_i32_0 : i32, i32
  }
}

</mosaic_0001>

<llo_original>
// kernel: head_forward.1
$region0: #{head_forward.1}
  #allocation0 [shape = 'u32[]', space=smem, size = 0x4, offset = 0x4, fixed_abs, tag = 'smem constant byte address 0x4 - core index']
  #allocation1 [shape = 'u32[72,128]{1,0:T(1,128)}', space=vmem, size = 0x9000, scoped, tag = 'internal scratch']
  #allocation2 [shape = 'f32[8,128]{1,0:T(8,128)}', space=vmem, size = 0x1000, scoped, tag = 'scratch operand']
  %s0 = inlined_call_operand.vmem [shape: bf16[8,128], index: 0, kind: input, shape index: {}]
  %s1 = inlined_call_operand.hbm [shape: bf16[128,128], index: 1, kind: input, shape index: {}]
  %s2 = inlined_call_operand.vmem [shape: f32[1,128], index: 2, kind: input, shape index: {}]
  %s3 = inlined_call_operand.vmem [shape: f32[1,128], index: 3, kind: input, shape index: {}]
  %s4 = inlined_call_operand.vmem [shape: f32[1,128], index: 4, kind: input, shape index: {}]
  %s5 = inlined_call_operand.hbm [shape: bf16[128,128], index: 5, kind: input, shape index: {}]
  %s6 = inlined_call_operand.vmem [shape: f32[1,128], index: 6, kind: input, shape index: {}]
  %s7 = inlined_call_operand.hbm [shape: f32[8,128], index: 7, kind: output, shape index: {}]
  %s8 = sld [smem:[#allocation0]]
  $region54: #{head_forward.1} parent=0
    _
  %s10 = ssub.s32 1, %s8
  %s11 = scalar_select 0, %s10, %s8
  $region1: #{head_forward.1} parent=0
    #allocation3 [shape = 'u8[32768]{0}', space=vmem, size = 0x8000, scoped, tag = 'input window, operand 1, single buffered']
    #allocation4 [shape = 's32[1]{0}', space=sflag, size = 0x4, scoped, tag = 'scoped memory for head_forward.1']
    #allocation5 [shape = 's32[1]{0}', space=sflag, size = 0x4, scoped, tag = 'scoped memory for head_forward.1']
    #allocation6 [shape = 'u8[32768]{0}', space=vmem, size = 0x8000, scoped, tag = 'input window, operand 5, single buffered']
    #allocation7 [shape = 's32[1]{0}', space=sflag, size = 0x4, scoped, tag = 'scoped memory for head_forward.1']
    #allocation8 [shape = 'u8[4096]{0}', space=vmem, size = 0x1000, scoped, tag = 'output window, operand 0, single buffered']
    %12 = vsyncpa [#allocation4], 0
    %13 = vsyncpa [#allocation7], 0
    %14 = vsyncpa [#allocation5], 0
    // Predicated region
    $region2: #{head_forward.1} parent=1 // pred_check
      _
    $region3: #{head_forward.1} parent=1 // pred_check_branch
      %16 = sbr.rel (0) target = $region5
    $region4: #{head_forward.1} parent=1 // pred_region
      _
    $region5: #{head_forward.1} parent=1 // pred_fallthru
      _
    // Predicated region
    $region6: #{head_forward.1} parent=1 // pred_check
      _
    $region7: #{head_forward.1} parent=1 // pred_check_branch
      %18 = sbr.rel (0) target = $region9
    $region8: #{head_forward.1} parent=1 // pred_region
      %20 = vsyncadd [#allocation4], 0
      %s21 = sshll.u32 %s1, 4
      %s22 = int_to_ptr.hbm [resolvable:$true] %s21
      %s23 = sshll.u32 [#allocation3], 4
      %s24 = int_to_ptr.vmem [resolvable:$true] %s23
      %29 = dma.hbm_to_vmem [thread:$0]  %s22, 1024, %s24, [#allocation4], 64, 64, 4
    $region9: #{head_forward.1} parent=1 // pred_fallthru
      _
    // Predicated region
    $region10: #{head_forward.1} parent=1 // pred_check
      _
    $region11: #{head_forward.1} parent=1 // pred_check_branch
      %31 = sbr.rel (0) target = $region13
    $region12: #{head_forward.1} parent=1 // pred_region
      _
    $region13: #{head_forward.1} parent=1 // pred_fallthru
      _
    // Predicated region
    $region14: #{head_forward.1} parent=1 // pred_check
      _
    $region15: #{head_forward.1} parent=1 // pred_check_branch
      %33 = sbr.rel (0) target = $region17
    $region16: #{head_forward.1} parent=1 // pred_region
      _
    $region17: #{head_forward.1} parent=1 // pred_fallthru
      _
    // Predicated region
    $region18: #{head_forward.1} parent=1 // pred_check
      _
    $region19: #{head_forward.1} parent=1 // pred_check_branch
      %35 = sbr.rel (0) target = $region21
    $region20: #{head_forward.1} parent=1 // pred_region
      _
    $region21: #{head_forward.1} parent=1 // pred_fallthru
      _
    // Predicated region
    $region22: #{head_forward.1} parent=1 // pred_check
      _
    $region23: #{head_forward.1} parent=1 // pred_check_branch
      %37 = sbr.rel (0) target = $region25
    $region24: #{head_forward.1} parent=1 // pred_region
      %39 = vsyncadd [#allocation7], 0
      %s40 = sshll.u32 %s5, 4
      %s41 = int_to_ptr.hbm [resolvable:$true] %s40
      %s42 = sshll.u32 [#allocation6], 4
      %s43 = int_to_ptr.vmem [resolvable:$true] %s42
      %48 = dma.hbm_to_vmem [thread:$0]  %s41, 1024, %s43, [#allocation7], 64, 64, 4
    $region25: #{head_forward.1} parent=1 // pred_fallthru
      _
    // Predicated region
    $region26: #{head_forward.1} parent=1 // pred_check
      _
    $region27: #{head_forward.1} parent=1 // pred_check_branch
      %50 = sbr.rel (0) target = $region29
    $region28: #{head_forward.1} parent=1 // pred_region
      _
    $region29: #{head_forward.1} parent=1 // pred_fallthru
      _
    // Predicated region
    $region30: #{head_forward.1} parent=1 // pred_check
      _
    $region31: #{head_forward.1} parent=1 // pred_check_branch
      %52 = sbr.rel (0) target = $region33
    $region32: #{head_forward.1} parent=1 // pred_region
      %54 = dma.done [#allocation4], 1024
    $region33: #{head_forward.1} parent=1 // pred_fallthru
      _
    // Predicated region
    $region34: #{head_forward.1} parent=1 // pred_check
      _
    $region35: #{head_forward.1} parent=1 // pred_check_branch
      %56 = sbr.rel (0) target = $region37
    $region36: #{head_forward.1} parent=1 // pred_region
      %58 = dma.done [#allocation7], 1024
    $region37: #{head_forward.1} parent=1 // pred_fallthru
      _
    %p59 = scmp.eq.s32.totalorder 0, 0
    // Predicated region
    $region38: #{head_forward.1} parent=1 // pred_check
      %p60 = pneg %p59
    $region39: #{head_forward.1} parent=1 // pred_check_branch
      %62 = sbr.rel (%p60) target = $region41
    $region40: #{head_forward.1} parent=1 // pred_region
      %63 = vst [vmem:[#allocation2] sm:$0xff] 0.0
    $region41: #{head_forward.1} parent=1 // pred_fallthru
      _
    %v64 = vld [vmem:[%s0] sm:$0xf]
    %v65 = vld [vmem:[#allocation3] sm:$0xf]
    %v66 = vld [vmem:[#allocation3 + $0x4] sm:$0xf]
    %v67 = vld [vmem:[#allocation3 + $0x8] sm:$0xf]
    %v68 = vld [vmem:[#allocation3 + $0xc] sm:$0xf]
    %v69 = vld [vmem:[#allocation3 + $0x10] sm:$0xf]
    %v70 = vld [vmem:[#allocation3 + $0x14] sm:$0xf]
    %v71 = vld [vmem:[#allocation3 + $0x18] sm:$0xf]
    %v72 = vld [vmem:[#allocation3 + $0x1c] sm:$0xf]
    %v73 = vld [vmem:[#allocation3 + $0x20] sm:$0xf]
    %v74 = vld [vmem:[#allocation3 + $0x24] sm:$0xf]
    %v75 = vld [vmem:[#allocation3 + $0x28] sm:$0xf]
    %v76 = vld [vmem:[#allocation3 + $0x2c] sm:$0xf]
    %v77 = vld [vmem:[#allocation3 + $0x30] sm:$0xf]
    %v78 = vld [vmem:[#allocation3 + $0x34] sm:$0xf]
    %v79 = vld [vmem:[#allocation3 + $0x38] sm:$0xf]
    %v80 = vld [vmem:[#allocation3 + $0x3c] sm:$0xf]
    %v81 = vld [vmem:[%s2] sm:$0x1]
    %v83 = vperm.slane %v81, 0
    %v101 = vunpack.c.l.b16 %v65
    %v102 = vunpack.c.l.b16 %v66
    %v103 = vunpack.c.l.b16 %v67
    %v104 = vunpack.c.l.b16 %v68
    %v105 = vunpack.c.l.b16 %v69
    %v106 = vunpack.c.l.b16 %v70
    %v107 = vunpack.c.l.b16 %v71
    %v108 = vunpack.c.l.b16 %v72
    %v109 = vunpack.c.l.b16 %v73
    %v110 = vunpack.c.l.b16 %v74
    %v111 = vunpack.c.l.b16 %v75
    %v112 = vunpack.c.l.b16 %v76
    %v113 = vunpack.c.l.b16 %v77
    %v114 = vunpack.c.l.b16 %v78
    %v115 = vunpack.c.l.b16 %v79
    %v116 = vunpack.c.l.b16 %v80
    %v117 = vpack.c.b16 %v102, %v101
    %v118 = vpack.c.b16 %v104, %v103
    %v119 = vpack.c.b16 %v106, %v105
    %v120 = vpack.c.b16 %v108, %v107
    %v121 = vpack.c.b16 %v110, %v109
    %v122 = vpack.c.b16 %v112, %v111
    %v123 = vpack.c.b16 %v114, %v113
    %v124 = vpack.c.b16 %v116, %v115
    %133 = vmatpush.bf16.msra.mxu0 %v124
    %134 = vmatpush.bf16.msra.mxu0 %v123
    %135 = vmatpush.bf16.msra.mxu0 %v122
    %136 = vmatpush.bf16.msra.mxu0 %v121
    %137 = vmatpush.bf16.msra.mxu0 %v120
    %138 = vmatpush.bf16.msra.mxu0 %v119
    %139 = vmatpush.bf16.msra.mxu0 %v118
    %140 = vmatpush.bf16.msra.mxu0 %v117
    %141 = vmatmul.bf16.gmra.mxu0 %v64
    %v142 = vpop.f32.mrf.mxu0
    %v143 = vadd.f32 %v83, %v142
    %v144 = vpop.f32.mrf.mxu0
    %145 = vdwg.mxu0
    %v146 = vrot.slane %v143, 4
    %v147 = vadd.f32 %v143, %v146
    %v148 = vrot.slane %v147, 2
    %v149 = vadd.f32 %v147, %v148
    %v150 = vrot.slane %v149, 1
    %v151 = vadd.f32 %v149, %v150
    %v152 = vmul.f32 %v143, %v143
    %v153 = vrot.slane %v152, 4
    %v154 = vadd.f32 %v152, %v153
    %v155 = vrot.slane %v154, 2
    %v156 = vadd.f32 %v154, %v155
    %v157 = vrot.slane %v156, 1
    %v158 = vadd.f32 %v156, %v157
    %v159 = vmul.f32 %v151, 0.125
    %v160 = vmul.f32 %v158, 0.125
    %v161 = vmul.f32 %v159, %v159
    %v162 = vsub.f32 %v160, %v161
    %v163 = vmax.f32 %v162, 0.0
    %v164 = vsub.f32 %v143, %v159
    %v165 = vadd.f32 %v163, 1e-05
    %v166 = vrsqrt.pop %v165
    %v167 = vmul.f32 %v166, %v165
    %v168 = vmul.f32 %v167, %v166
    %v169 = vmul.f32 0.5, %v168
    %v170 = vsub.f32 1.5, %v169
    %v171 = vmul.f32 %v166, %v170
    %vm172 = vweird.f32 %v165
    %vm173 = vweird.f32 %v166
    %vm174 = vmor %vm172, %vm173
    %v175 = vsel %vm174, %v166, %v171
    %v176 = vmul.f32 %v164, %v175
    %v177 = vld [vmem:[%s3] sm:$0x1]
    %v179 = vperm.slane %v177, 0
    %v181 = vmul.f32 %v176, %v179
    %v182 = vld [vmem:[%s4] sm:$0x1]
    %v184 = vperm.slane %v182, 0
    %v186 = vadd.f32 %v181, %v184
    %v187 = vmax.f32 %v186, 0.0
    %v188 = vld [vmem:[#allocation2] sm:$0xff]
    %v189 = vpack.c.bf16 %v187, %v187
    %v190 = vld [vmem:[#allocation6] sm:$0xf]
    %v191 = vld [vmem:[#allocation6 + $0x4] sm:$0xf]
    %v192 = vld [vmem:[#allocation6 + $0x8] sm:$0xf]
    %v193 = vld [vmem:[#allocation6 + $0xc] sm:$0xf]
    %v194 = vld [vmem:[#allocation6 + $0x10] sm:$0xf]
    %v195 = vld [vmem:[#allocation6 + $0x14] sm:$0xf]
    %v196 = vld [vmem:[#allocation6 + $0x18] sm:$0xf]
    %v197 = vld [vmem:[#allocation6 + $0x1c] sm:$0xf]
    %v198 = vld [vmem:[#allocation6 + $0x20] sm:$0xf]
    %v199 = vld [vmem:[#allocation6 + $0x24] sm:$0xf]
    %v200 = vld [vmem:[#allocation6 + $0x28] sm:$0xf]
    %v201 = vld [vmem:[#allocation6 + $0x2c] sm:$0xf]
    %v202 = vld [vmem:[#allocation6 + $0x30] sm:$0xf]
    %v203 = vld [vmem:[#allocation6 + $0x34] sm:$0xf]
    %v204 = vld [vmem:[#allocation6 + $0x38] sm:$0xf]
    %v205 = vld [vmem:[#allocation6 + $0x3c] sm:$0xf]
    %v222 = vunpack.c.l.b16 %v190
    %v223 = vunpack.c.l.b16 %v191
    %v224 = vunpack.c.l.b16 %v192
    %v225 = vunpack.c.l.b16 %v193
    %v226 = vunpack.c.l.b16 %v194
    %v227 = vunpack.c.l.b16 %v195
    %v228 = vunpack.c.l.b16 %v196
    %v229 = vunpack.c.l.b16 %v197
    %v230 = vunpack.c.l.b16 %v198
    %v231 = vunpack.c.l.b16 %v199
    %v232 = vunpack.c.l.b16 %v200
    %v233 = vunpack.c.l.b16 %v201
    %v234 = vunpack.c.l.b16 %v202
    %v235 = vunpack.c.l.b16 %v203
    %v236 = vunpack.c.l.b16 %v204
    %v237 = vunpack.c.l.b16 %v205
    %v238 = vpack.c.b16 %v223, %v222
    %v239 = vpack.c.b16 %v225, %v224
    %v240 = vpack.c.b16 %v227, %v226
    %v241 = vpack.c.b16 %v229, %v228
    %v242 = vpack.c.b16 %v231, %v230
    %v243 = vpack.c.b16 %v233, %v232
    %v244 = vpack.c.b16 %v235, %v234
    %v245 = vpack.c.b16 %v237, %v236
    %254 = vmatpush.bf16.msra.mxu0 %v245
    %255 = vmatpush.bf16.msra.mxu0 %v244
    %256 = vmatpush.bf16.msra.mxu0 %v243
    %257 = vmatpush.bf16.msra.mxu0 %v242
    %258 = vmatpush.bf16.msra.mxu0 %v241
    %259 = vmatpush.bf16.msra.mxu0 %v240
    %260 = vmatpush.bf16.msra.mxu0 %v239
    %261 = vmatpush.bf16.msra.mxu0 %v238
    %262 = vmatmul.bf16.gmra.mxu0 %v189
    %v263 = vpop.f32.mrf.mxu0
    %v264 = vadd.f32 0.0, %v263
    %v265 = vpop.f32.mrf.mxu0
    %266 = vdwg.mxu0
    %v267 = vadd.f32 %v188, %v264
    %268 = vst [vmem:[#allocation2] sm:$0xff] %v267
    // Predicated region
    $region42: #{head_forward.1} parent=1 // pred_check
      %p269 = pneg %p59
    $region43: #{head_forward.1} parent=1 // pred_check_branch
      %271 = sbr.rel (%p269) target = $region45
    $region44: #{head_forward.1} parent=1 // pred_region
      %v272 = vld [vmem:[#allocation2] sm:$0xff]
      %v273 = vld [vmem:[%s6] sm:$0x1]
      %v275 = vperm.slane %v273, 0
      %v277 = vadd.f32 %v272, %v275
      %278 = vst [vmem:[#allocation8] sm:$0xff] %v277
    $region45: #{head_forward.1} parent=1 // pred_fallthru
      _
    // Predicated region
    $region46: #{head_forward.1} parent=1 // pred_check
      _
    $region47: #{head_forward.1} parent=1 // pred_check_branch
      %280 = sbr.rel (0) target = $region49
    $region48: #{head_forward.1} parent=1 // pred_region
      %282 = vsyncadd [#allocation5], 0
      %s284 = sshll.u32 [#allocation8], 4
      %s285 = int_to_ptr.vmem [resolvable:$true] %s284
      %s286 = sshll.u32 %s7, 4
      %s287 = int_to_ptr.hbm [resolvable:$true] %s286
      %289 = dma.vmem_to_hbm [thread:$0]  %s285, 128, %s287, [#allocation5]
    $region49: #{head_forward.1} parent=1 // pred_fallthru
      _
    // Predicated region
    $region50: #{head_forward.1} parent=1 // pred_check
      _
    $region51: #{head_forward.1} parent=1 // pred_check_branch
      %291 = sbr.rel (0) target = $region53
    $region52: #{head_forward.1} parent=1 // pred_region
      %293 = dma.done [#allocation5], 128
    $region53: #{head_forward.1} parent=1 // pred_fallthru
      _
    %294 = vsyncpa [#allocation4], 1
    %295 = vsyncpa [#allocation7], 1
    %296 = vsyncpa [#allocation5], 1

</llo_original>
